<compile_context>
chip_gen: v5e
topology: v5e:2x2
jax: 0.10.0
libtpu: 0.0.40
codegen_flags: <defaults>
</compile_context>

<pallas_src>
import math

import jax
import jax.numpy as jnp
from jax import lax
from jax.experimental import pallas as pl
from jax.experimental.pallas import tpu as pltpu


def _make_attn_kernel(num_wkr, num_tsk, feat_dim):
    """Builds a kernel specialized on the (static) group sizes."""
    scale = 1.0 / math.sqrt(feat_dim)
    # (start, stop) row ranges of the two groups inside the unsplit features.
    group_rows = ((0, num_wkr), (num_wkr, num_wkr + num_tsk))

    def kernel(x_ref, w_ref, b_ref, o_ref):
        """Fused QKV projection + single-head attention for both groups.

        x_ref: VMEM [N_total, D]      unsplit input features
        w_ref: VMEM [2, 3, D, D]      (group, q/k/v, in, out) weights
        b_ref: VMEM [2, 3, 1, D]      (group, q/k/v) biases
        o_ref: VMEM [N_total, D]      attention output (rows per group)
        """
        for g, (lo, hi) in enumerate(group_rows):  # static unroll, 2 groups
            x = x_ref[lo:hi]  # static slice -> [n_g, D]

            # Three lane-aligned [n,D]x[D,D] MXU dots (outputs start at lane 0).
            q = jnp.dot(x, w_ref[g, 0], preferred_element_type=jnp.float32) + b_ref[g, 0]
            k = jnp.dot(x, w_ref[g, 1], preferred_element_type=jnp.float32) + b_ref[g, 1]
            v = jnp.dot(x, w_ref[g, 2], preferred_element_type=jnp.float32) + b_ref[g, 2]

            # scores = q @ k^T (contract last dims; no explicit transpose).
            s = lax.dot_general(
                q, k,
                dimension_numbers=(((1,), (1,)), ((), ())),
                preferred_element_type=jnp.float32,
            ) * scale

            # Numerically-stable softmax, exact normalization (f32 throughout).
            m = jnp.max(s, axis=-1, keepdims=True)
            p = jnp.exp(s - m)
            w_att = p / jnp.sum(p, axis=-1, keepdims=True)

            o_ref[lo:hi] = jnp.dot(
                w_att, v, preferred_element_type=jnp.float32
            ).astype(o_ref.dtype)

    return kernel


def _fused_attention(features, w_qkv, b_qkv, num_wkr, num_tsk):
    """Single gridless pallas_call handling both attention heads."""
    n_tot, d = features.shape
    kernel = _make_attn_kernel(num_wkr, num_tsk, d)

    # Advisory cost so XLA can schedule neighbors around this tiny call.
    flops = 0
    transcendentals = 0
    for n in (num_wkr, num_tsk):
        flops += 2 * n * d * (3 * d) + 2 * n * n * d * 2  # QKV proj + QK^T + PV
        transcendentals += n * n                          # exp in softmax
    cost = pl.CostEstimate(
        flops=flops,
        transcendentals=transcendentals,
        bytes_accessed=4 * (features.size + w_qkv.size + b_qkv.size + n_tot * d),
    )

    return pl.pallas_call(
        kernel,
        out_shape=jax.ShapeDtypeStruct((n_tot, d), jnp.float32),
        in_specs=[
            pl.BlockSpec(memory_space=pltpu.MemorySpace.VMEM),
            pl.BlockSpec(memory_space=pltpu.MemorySpace.VMEM),
            pl.BlockSpec(memory_space=pltpu.MemorySpace.VMEM),
        ],
        out_specs=pl.BlockSpec(memory_space=pltpu.MemorySpace.VMEM),
        cost_estimate=cost,
    )(features, w_qkv, b_qkv)


class SelfAttentionSingleHead:
    """JAX/Pallas port of the PyTorch self_attention_single_head module."""

    def __init__(self, feat_dim, num_wkr, num_tsk, key):
        self.feat_dim = feat_dim
        self.num_wkr = num_wkr
        self.num_tsk = num_tsk

        # Deterministic init mimicking nn.Linear default: U(-1/sqrt(in), 1/sqrt(in))
        bound = 1.0 / math.sqrt(feat_dim)
        keys = jax.random.split(key, 12)

        def lin(kw, kb):
            w = jax.random.uniform(kw, (feat_dim, feat_dim), jnp.float32, -bound, bound)
            b = jax.random.uniform(kb, (1, feat_dim), jnp.float32, -bound, bound)
            # store pre-transposed to [in, out] so the kernel computes x @ W + b
            return w.T, b

        (self.wq_wkr, self.bq_wkr) = lin(keys[0], keys[1])
        (self.wk_wkr, self.bk_wkr) = lin(keys[2], keys[3])
        (self.wv_wkr, self.bv_wkr) = lin(keys[4], keys[5])
        (self.wq_tsk, self.bq_tsk) = lin(keys[6], keys[7])
        (self.wk_tsk, self.bk_tsk) = lin(keys[8], keys[9])
        (self.wv_tsk, self.bv_tsk) = lin(keys[10], keys[11])

        # Lane-aligned parameter layout: separate Q/K/V axis instead of a fused
        # [D, 3D] matrix (avoids slicing a 96-lane result at offsets 32/64).
        #   w_qkv: [2, 3, D, D]   (group, q/k/v, in, out)
        #   b_qkv: [2, 3, 1, D]
        self.w_qkv = jnp.stack([
            jnp.stack([self.wq_wkr, self.wk_wkr, self.wv_wkr], axis=0),
            jnp.stack([self.wq_tsk, self.wk_tsk, self.wv_tsk], axis=0),
        ], axis=0)
        self.b_qkv = jnp.stack([
            jnp.stack([self.bq_wkr, self.bk_wkr, self.bv_wkr], axis=0),
            jnp.stack([self.bq_tsk, self.bk_tsk, self.bv_tsk], axis=0),
        ], axis=0)

    def __call__(self, features):
        n_used = self.num_wkr + self.num_tsk
        # The kernel reads/writes each group's rows with static slices, so no
        # wrapper-side padding / stacking / trailing concatenation is needed.
        return _fused_attention(
            features[:n_used], self.w_qkv, self.b_qkv, self.num_wkr, self.num_tsk
        )


def _reference(features, mod):
    """Pure-JAX reference mirroring the PyTorch forward."""
    def attn(x, wq, wk, wv, bq, bk, bv):
        q = x @ wq + bq
        k = x @ wk + bk
        v = x @ wv + bv
        s = (q @ k.T) / math.sqrt(x.shape[-1])
        w = jax.nn.softmax(s, axis=-1)
        return w @ v

    wkr = attn(features[0:mod.num_wkr],
               mod.wq_wkr, mod.wk_wkr, mod.wv_wkr,
               mod.bq_wkr, mod.bk_wkr, mod.bv_wkr)
    tsk = attn(features[mod.num_wkr:mod.num_wkr + mod.num_tsk],
               mod.wq_tsk, mod.wk_tsk, mod.wv_tsk,
               mod.bq_tsk, mod.bk_tsk, mod.bv_tsk)
    return jnp.concatenate([wkr, tsk], axis=-2)


if __name__ == "__main__":
    feat_dim = 32
    num_wkr = 8
    num_tsk = 8

    key = jax.random.PRNGKey(0)
    k_params, k_feat = jax.random.split(key)

    mod = SelfAttentionSingleHead(feat_dim, num_wkr, num_tsk, k_params)
    features = jax.random.normal(k_feat, (num_wkr + num_tsk, feat_dim), jnp.float32)

    out = mod(features)
    out = jax.block_until_ready(out)

    ref = _reference(features, mod)
    assert out.shape == (num_wkr + num_tsk, feat_dim)
    # Tolerance covers MXU default-precision differences between the Pallas
    # kernel and the XLA reference path.
    assert jnp.allclose(out, ref, atol=2e-3, rtol=2e-3)

    print("KERNEL_OK")
</pallas_src>

<mosaic_0001>
module attributes {stable_mosaic.version = 11 : i64} {
  func.func @kernel(%arg0: memref<16x32xf32, #tpu.memory_space<vmem>>, %arg1: memref<2x3x32x32xf32, #tpu.memory_space<vmem>>, %arg2: memref<2x3x1x32xf32, #tpu.memory_space<vmem>>, %arg3: memref<16x32xf32, #tpu.memory_space<vmem>>) attributes {dimension_semantics = [], scalar_prefetch = 0 : i64, scratch_operands = 0 : i64, tpu.core_type = #tpu.core_type<tc>} {
    %c0 = arith.constant 0 : index
    %c0_0 = arith.constant 0 : index
    %0 = vector.load %arg0[%c0, %c0_0] : memref<16x32xf32, #tpu.memory_space<vmem>>, vector<8x32xf32>
    %c0_1 = arith.constant 0 : index
    %c0_2 = arith.constant 0 : index
    %c0_3 = arith.constant 0 : index
    %c0_4 = arith.constant 0 : index
    %1 = vector.load %arg1[%c0_1, %c0_2, %c0_3, %c0_4] : memref<2x3x32x32xf32, #tpu.memory_space<vmem>>, vector<1x1x32x32xf32>
    %2 = vector.shape_cast %1 : vector<1x1x32x32xf32> to vector<32x32xf32>
    %cst = arith.constant dense<0.000000e+00> : vector<8x32xf32>
    %3 = tpu.matmul %0, %2, %cst {dimension_numbers = #tpu.dot_dimension_numbers<[1], [0], [0], [1], [0, 0, 1, 1], [], []>} : vector<8x32xf32>, vector<32x32xf32>, vector<8x32xf32> -> vector<8x32xf32>
    %c0_5 = arith.constant 0 : index
    %c0_6 = arith.constant 0 : index
    %c0_7 = arith.constant 0 : index
    %c0_8 = arith.constant 0 : index
    %4 = vector.load %arg2[%c0_5, %c0_6, %c0_7, %c0_8] : memref<2x3x1x32xf32, #tpu.memory_space<vmem>>, vector<1x1x1x32xf32>
    %5 = vector.shape_cast %4 : vector<1x1x1x32xf32> to vector<1x32xf32>
    %6 = vector.broadcast %5 : vector<1x32xf32> to vector<8x32xf32>
    %7 = arith.addf %3, %6 : vector<8x32xf32>
    %c0_9 = arith.constant 0 : index
    %c1 = arith.constant 1 : index
    %c0_10 = arith.constant 0 : index
    %c0_11 = arith.constant 0 : index
    %8 = vector.load %arg1[%c0_9, %c1, %c0_10, %c0_11] : memref<2x3x32x32xf32, #tpu.memory_space<vmem>>, vector<1x1x32x32xf32>
    %9 = vector.shape_cast %8 : vector<1x1x32x32xf32> to vector<32x32xf32>
    %cst_12 = arith.constant dense<0.000000e+00> : vector<8x32xf32>
    %10 = tpu.matmul %0, %9, %cst_12 {dimension_numbers = #tpu.dot_dimension_numbers<[1], [0], [0], [1], [0, 0, 1, 1], [], []>} : vector<8x32xf32>, vector<32x32xf32>, vector<8x32xf32> -> vector<8x32xf32>
    %c0_13 = arith.constant 0 : index
    %c1_14 = arith.constant 1 : index
    %c0_15 = arith.constant 0 : index
    %c0_16 = arith.constant 0 : index
    %11 = vector.load %arg2[%c0_13, %c1_14, %c0_15, %c0_16] : memref<2x3x1x32xf32, #tpu.memory_space<vmem>>, vector<1x1x1x32xf32>
    %12 = vector.shape_cast %11 : vector<1x1x1x32xf32> to vector<1x32xf32>
    %13 = vector.broadcast %12 : vector<1x32xf32> to vector<8x32xf32>
    %14 = arith.addf %10, %13 : vector<8x32xf32>
    %c0_17 = arith.constant 0 : index
    %c2 = arith.constant 2 : index
    %c0_18 = arith.constant 0 : index
    %c0_19 = arith.constant 0 : index
    %15 = vector.load %arg1[%c0_17, %c2, %c0_18, %c0_19] : memref<2x3x32x32xf32, #tpu.memory_space<vmem>>, vector<1x1x32x32xf32>
    %16 = vector.shape_cast %15 : vector<1x1x32x32xf32> to vector<32x32xf32>
    %cst_20 = arith.constant dense<0.000000e+00> : vector<8x32xf32>
    %17 = tpu.matmul %0, %16, %cst_20 {dimension_numbers = #tpu.dot_dimension_numbers<[1], [0], [0], [1], [0, 0, 1, 1], [], []>} : vector<8x32xf32>, vector<32x32xf32>, vector<8x32xf32> -> vector<8x32xf32>
    %c0_21 = arith.constant 0 : index
    %c2_22 = arith.constant 2 : index
    %c0_23 = arith.constant 0 : index
    %c0_24 = arith.constant 0 : index
    %18 = vector.load %arg2[%c0_21, %c2_22, %c0_23, %c0_24] : memref<2x3x1x32xf32, #tpu.memory_space<vmem>>, vector<1x1x1x32xf32>
    %19 = vector.shape_cast %18 : vector<1x1x1x32xf32> to vector<1x32xf32>
    %20 = vector.broadcast %19 : vector<1x32xf32> to vector<8x32xf32>
    %21 = arith.addf %17, %20 : vector<8x32xf32>
    %cst_25 = arith.constant dense<0.000000e+00> : vector<8x8xf32>
    %22 = tpu.matmul %7, %14, %cst_25 {dimension_numbers = #tpu.dot_dimension_numbers<[1], [1], [0], [0], [0, 0, 1, 0], [], []>} : vector<8x32xf32>, vector<8x32xf32>, vector<8x8xf32> -> vector<8x8xf32>
    %cst_26 = arith.constant 0.176776692 : f32
    %23 = vector.broadcast %cst_26 : f32 to vector<8x8xf32>
    %24 = arith.mulf %22, %23 : vector<8x8xf32>
    %cst_27 = arith.constant dense<0xFF800000> : vector<8xf32>
    %25 = vector.multi_reduction <maximumf>, %24, %cst_27 [1] : vector<8x8xf32> to vector<8xf32>
    %26 = vector.shape_cast %25 : vector<8xf32> to vector<8x1xf32>
    %27 = vector.broadcast %26 : vector<8x1xf32> to vector<8x8xf32>
    %28 = arith.subf %24, %27 : vector<8x8xf32>
    %29 = math.exp %28 : vector<8x8xf32>
    %cst_28 = arith.constant dense<0.000000e+00> : vector<8xf32>
    %30 = vector.multi_reduction <add>, %29, %cst_28 [1] : vector<8x8xf32> to vector<8xf32>
    %31 = vector.shape_cast %30 : vector<8xf32> to vector<8x1xf32>
    %32 = vector.broadcast %31 : vector<8x1xf32> to vector<8x8xf32>
    %33 = arith.divf %29, %32 : vector<8x8xf32>
    %cst_29 = arith.constant dense<0.000000e+00> : vector<8x32xf32>
    %34 = tpu.matmul %33, %21, %cst_29 {dimension_numbers = #tpu.dot_dimension_numbers<[1], [0], [0], [1], [0, 0, 1, 1], [], []>} : vector<8x8xf32>, vector<8x32xf32>, vector<8x32xf32> -> vector<8x32xf32>
    %c0_30 = arith.constant 0 : index
    %c0_31 = arith.constant 0 : index
    %35 = vector.load %arg3[%c0_30, %c0_31] : memref<16x32xf32, #tpu.memory_space<vmem>>, vector<8x32xf32>
    tpu.vector_store %arg3[%c0_30, %c0_31], %34 {strides = array<i32>} : memref<16x32xf32, #tpu.memory_space<vmem>>, vector<8x32xf32>,
    %c8 = arith.constant 8 : index
    %c0_32 = arith.constant 0 : index
    %36 = vector.load %arg0[%c8, %c0_32] : memref<16x32xf32, #tpu.memory_space<vmem>>, vector<8x32xf32>
    %c1_33 = arith.constant 1 : index
    %c0_34 = arith.constant 0 : index
    %c0_35 = arith.constant 0 : index
    %c0_36 = arith.constant 0 : index
    %37 = vector.load %arg1[%c1_33, %c0_34, %c0_35, %c0_36] : memref<2x3x32x32xf32, #tpu.memory_space<vmem>>, vector<1x1x32x32xf32>
    %38 = vector.shape_cast %37 : vector<1x1x32x32xf32> to vector<32x32xf32>
    %cst_37 = arith.constant dense<0.000000e+00> : vector<8x32xf32>
    %39 = tpu.matmul %36, %38, %cst_37 {dimension_numbers = #tpu.dot_dimension_numbers<[1], [0], [0], [1], [0, 0, 1, 1], [], []>} : vector<8x32xf32>, vector<32x32xf32>, vector<8x32xf32> -> vector<8x32xf32>
    %c1_38 = arith.constant 1 : index
    %c0_39 = arith.constant 0 : index
    %c0_40 = arith.constant 0 : index
    %c0_41 = arith.constant 0 : index
    %40 = vector.load %arg2[%c1_38, %c0_39, %c0_40, %c0_41] : memref<2x3x1x32xf32, #tpu.memory_space<vmem>>, vector<1x1x1x32xf32>
    %41 = vector.shape_cast %40 : vector<1x1x1x32xf32> to vector<1x32xf32>
    %42 = vector.broadcast %41 : vector<1x32xf32> to vector<8x32xf32>
    %43 = arith.addf %39, %42 : vector<8x32xf32>
    %c1_42 = arith.constant 1 : index
    %c1_43 = arith.constant 1 : index
    %c0_44 = arith.constant 0 : index
    %c0_45 = arith.constant 0 : index
    %44 = vector.load %arg1[%c1_42, %c1_43, %c0_44, %c0_45] : memref<2x3x32x32xf32, #tpu.memory_space<vmem>>, vector<1x1x32x32xf32>
    %45 = vector.shape_cast %44 : vector<1x1x32x32xf32> to vector<32x32xf32>
    %cst_46 = arith.constant dense<0.000000e+00> : vector<8x32xf32>
    %46 = tpu.matmul %36, %45, %cst_46 {dimension_numbers = #tpu.dot_dimension_numbers<[1], [0], [0], [1], [0, 0, 1, 1], [], []>} : vector<8x32xf32>, vector<32x32xf32>, vector<8x32xf32> -> vector<8x32xf32>
    %c1_47 = arith.constant 1 : index
    %c1_48 = arith.constant 1 : index
    %c0_49 = arith.constant 0 : index
    %c0_50 = arith.constant 0 : index
    %47 = vector.load %arg2[%c1_47, %c1_48, %c0_49, %c0_50] : memref<2x3x1x32xf32, #tpu.memory_space<vmem>>, vector<1x1x1x32xf32>
    %48 = vector.shape_cast %47 : vector<1x1x1x32xf32> to vector<1x32xf32>
    %49 = vector.broadcast %48 : vector<1x32xf32> to vector<8x32xf32>
    %50 = arith.addf %46, %49 : vector<8x32xf32>
    %c1_51 = arith.constant 1 : index
    %c2_52 = arith.constant 2 : index
    %c0_53 = arith.constant 0 : index
    %c0_54 = arith.constant 0 : index
    %51 = vector.load %arg1[%c1_51, %c2_52, %c0_53, %c0_54] : memref<2x3x32x32xf32, #tpu.memory_space<vmem>>, vector<1x1x32x32xf32>
    %52 = vector.shape_cast %51 : vector<1x1x32x32xf32> to vector<32x32xf32>
    %cst_55 = arith.constant dense<0.000000e+00> : vector<8x32xf32>
    %53 = tpu.matmul %36, %52, %cst_55 {dimension_numbers = #tpu.dot_dimension_numbers<[1], [0], [0], [1], [0, 0, 1, 1], [], []>} : vector<8x32xf32>, vector<32x32xf32>, vector<8x32xf32> -> vector<8x32xf32>
    %c1_56 = arith.constant 1 : index
    %c2_57 = arith.constant 2 : index
    %c0_58 = arith.constant 0 : index
    %c0_59 = arith.constant 0 : index
    %54 = vector.load %arg2[%c1_56, %c2_57, %c0_58, %c0_59] : memref<2x3x1x32xf32, #tpu.memory_space<vmem>>, vector<1x1x1x32xf32>
    %55 = vector.shape_cast %54 : vector<1x1x1x32xf32> to vector<1x32xf32>
    %56 = vector.broadcast %55 : vector<1x32xf32> to vector<8x32xf32>
    %57 = arith.addf %53, %56 : vector<8x32xf32>
    %cst_60 = arith.constant dense<0.000000e+00> : vector<8x8xf32>
    %58 = tpu.matmul %43, %50, %cst_60 {dimension_numbers = #tpu.dot_dimension_numbers<[1], [1], [0], [0], [0, 0, 1, 0], [], []>} : vector<8x32xf32>, vector<8x32xf32>, vector<8x8xf32> -> vector<8x8xf32>
    %cst_61 = arith.constant 0.176776692 : f32
    %59 = vector.broadcast %cst_61 : f32 to vector<8x8xf32>
    %60 = arith.mulf %58, %59 : vector<8x8xf32>
    %cst_62 = arith.constant dense<0xFF800000> : vector<8xf32>
    %61 = vector.multi_reduction <maximumf>, %60, %cst_62 [1] : vector<8x8xf32> to vector<8xf32>
    %62 = vector.shape_cast %61 : vector<8xf32> to vector<8x1xf32>
    %63 = vector.broadcast %62 : vector<8x1xf32> to vector<8x8xf32>
    %64 = arith.subf %60, %63 : vector<8x8xf32>
    %65 = math.exp %64 : vector<8x8xf32>
    %cst_63 = arith.constant dense<0.000000e+00> : vector<8xf32>
    %66 = vector.multi_reduction <add>, %65, %cst_63 [1] : vector<8x8xf32> to vector<8xf32>
    %67 = vector.shape_cast %66 : vector<8xf32> to vector<8x1xf32>
    %68 = vector.broadcast %67 : vector<8x1xf32> to vector<8x8xf32>
    %69 = arith.divf %65, %68 : vector<8x8xf32>
    %cst_64 = arith.constant dense<0.000000e+00> : vector<8x32xf32>
    %70 = tpu.matmul %69, %57, %cst_64 {dimension_numbers = #tpu.dot_dimension_numbers<[1], [0], [0], [1], [0, 0, 1, 1], [], []>} : vector<8x8xf32>, vector<8x32xf32>, vector<8x32xf32> -> vector<8x32xf32>
    %c8_65 = arith.constant 8 : index
    %c0_66 = arith.constant 0 : index
    %71 = vector.load %arg3[%c8_65, %c0_66] : memref<16x32xf32, #tpu.memory_space<vmem>>, vector<8x32xf32>
    tpu.vector_store %arg3[%c8_65, %c0_66], %70 {strides = array<i32>} : memref<16x32xf32, #tpu.memory_space<vmem>>, vector<8x32xf32>,
    return
  }
}

</mosaic_0001>

<llo_original>
// kernel: tpu_custom_call.1
$region0: #{tpu_custom_call.1}
  #allocation0 [shape = 'u32[]', space=smem, size = 0x4, offset = 0x4, fixed_abs, tag = 'smem constant byte address 0x4 - core index']
  #allocation1 [shape = 'u32[72,128]{1,0:T(1,128)}', space=vmem, size = 0x9000, scoped, tag = 'internal scratch']
  %s0 = inlined_call_operand.hbm [shape: f32[16,32], index: 0, kind: input, shape index: {}]
  %s1 = inlined_call_operand.hbm [shape: f32[2,3,32,32], index: 1, kind: input, shape index: {}]
  %s2 = inlined_call_operand.hbm [shape: f32[2,3,1,32], index: 2, kind: input, shape index: {}]
  %s3 = inlined_call_operand.hbm [shape: f32[16,32], index: 3, kind: output, shape index: {}]
  %s4 = sld [smem:[#allocation0]]
  $region34: #{tpu_custom_call.1} parent=0
    _
  %s6 = ssub.s32 1, %s4
  %s7 = scalar_select 0, %s6, %s4
  $region1: #{tpu_custom_call.1} parent=0
    #allocation2 [shape = 'u8[8192]{0}', space=vmem, size = 0x2000, scoped, tag = 'input window, operand 0, single buffered']
    #allocation3 [shape = 's32[1]{0}', space=sflag, size = 0x4, scoped, tag = 'scoped memory for tpu_custom_call.1']
    #allocation4 [shape = 's32[1]{0}', space=sflag, size = 0x4, scoped, tag = 'scoped memory for tpu_custom_call.1']
    #allocation5 [shape = 'u8[98304]{0}', space=vmem, size = 0x18000, scoped, tag = 'input window, operand 1, single buffered']
    #allocation6 [shape = 's32[1]{0}', space=sflag, size = 0x4, scoped, tag = 'scoped memory for tpu_custom_call.1']
    #allocation7 [shape = 'u8[3072]{0}', space=vmem, size = 0xc00, scoped, tag = 'input window, operand 2, single buffered']
    #allocation8 [shape = 'u8[8192]{0}', space=vmem, size = 0x2000, scoped, tag = 'output window, operand 0, single buffered']
    %8 = vsyncpa [#allocation3], 0
    %9 = vsyncpa [#allocation6], 0
    %10 = vsyncpa [#allocation4], 0
    // Predicated region
    $region2: #{tpu_custom_call.1} parent=1 // pred_check
      _
    $region3: #{tpu_custom_call.1} parent=1 // pred_check_branch
      %12 = sbr.rel (0) target = $region5
    $region4: #{tpu_custom_call.1} parent=1 // pred_region
      %14 = vsyncadd [#allocation3], 0
      %s15 = sshll.u32 %s0, 4
      %s16 = int_to_ptr.hbm [resolvable:$true] %s15
      %s17 = sshll.u32 [#allocation2], 4
      %s18 = int_to_ptr.vmem [resolvable:$true] %s17
      %23 = dma.hbm_to_vmem [thread:$0]  %s16, 256, %s18, [#allocation3], 128, 128, 8
    $region5: #{tpu_custom_call.1} parent=1 // pred_fallthru
      _
    // Predicated region
    $region6: #{tpu_custom_call.1} parent=1 // pred_check
      _
    $region7: #{tpu_custom_call.1} parent=1 // pred_check_branch
      %25 = sbr.rel (0) target = $region9
    $region8: #{tpu_custom_call.1} parent=1 // pred_region
      %27 = vsyncadd [#allocation6], 0
      %s28 = sshll.u32 %s1, 4
      %s29 = int_to_ptr.hbm [resolvable:$true] %s28
      %s30 = sshll.u32 [#allocation5], 4
      %s31 = int_to_ptr.vmem [resolvable:$true] %s30
      %36 = dma.hbm_to_vmem [thread:$0]  %s29, 3072, %s31, [#allocation6], 128, 128, 8
    $region9: #{tpu_custom_call.1} parent=1 // pred_fallthru
      _
    // Predicated region
    $region10: #{tpu_custom_call.1} parent=1 // pred_check
      _
    $region11: #{tpu_custom_call.1} parent=1 // pred_check_branch
      %38 = sbr.rel (0) target = $region13
    $region12: #{tpu_custom_call.1} parent=1 // pred_region
      %40 = vsyncadd [#allocation6], 0
      %s41 = sshll.u32 %s2, 4
      %s42 = int_to_ptr.hbm [resolvable:$true] %s41
      %s43 = sshll.u32 [#allocation7], 4
      %s44 = int_to_ptr.vmem [resolvable:$true] %s43
      %49 = dma.hbm_to_vmem [thread:$0]  %s42, 96, %s44, [#allocation6], 16, 16, 1
    $region13: #{tpu_custom_call.1} parent=1 // pred_fallthru
      _
    // Predicated region
    $region14: #{tpu_custom_call.1} parent=1 // pred_check
      _
    $region15: #{tpu_custom_call.1} parent=1 // pred_check_branch
      %51 = sbr.rel (0) target = $region17
    $region16: #{tpu_custom_call.1} parent=1 // pred_region
      %53 = dma.done [#allocation3], 256
    $region17: #{tpu_custom_call.1} parent=1 // pred_fallthru
      _
    // Predicated region
    $region18: #{tpu_custom_call.1} parent=1 // pred_check
      _
    $region19: #{tpu_custom_call.1} parent=1 // pred_check_branch
      %55 = sbr.rel (0) target = $region21
    $region20: #{tpu_custom_call.1} parent=1 // pred_region
      %57 = dma.done [#allocation6], 3072
    $region21: #{tpu_custom_call.1} parent=1 // pred_fallthru
      _
    // Predicated region
    $region22: #{tpu_custom_call.1} parent=1 // pred_check
      _
    $region23: #{tpu_custom_call.1} parent=1 // pred_check_branch
      %59 = sbr.rel (0) target = $region25
    $region24: #{tpu_custom_call.1} parent=1 // pred_region
      %61 = dma.done [#allocation6], 96
    $region25: #{tpu_custom_call.1} parent=1 // pred_fallthru
      _
    %v62 = vld [vmem:[#allocation2] sm:$0xff]
    %v63 = vld [vmem:[#allocation5] sm:$0xff]
    %v64 = vld [vmem:[#allocation5 + $0x8] sm:$0xff]
    %v65 = vld [vmem:[#allocation5 + $0x10] sm:$0xff]
    %v66 = vld [vmem:[#allocation5 + $0x18] sm:$0xff]
    %v67 = vld [vmem:[#allocation7] sm:$0x1]
    %v69 = vperm.slane %v67, 0
    %vm71 = vcmask 261120
    %v73 = vsel %vm71, %v62, 0
    %75 = vmatpush.msra.mxu0 0.0
    %76 = vmatpush.msra.mxu0 0.0
    %77 = vmatpush.msra.mxu0 0.0
    %78 = vmatpush.msra.mxu0 0.0
    %79 = vmatpush.msra.mxu0 0.0
    %80 = vmatpush.msra.mxu0 0.0
    %81 = vmatpush.msra.mxu0 0.0
    %82 = vmatpush.msra.mxu0 0.0
    %83 = vmatpush.msra.mxu0 0.0
    %84 = vmatpush.msra.mxu0 0.0
    %85 = vmatpush.msra.mxu0 0.0
    %86 = vmatpush.msra.mxu0 0.0
    %87 = vmatpush.msra.mxu0 %v66
    %88 = vmatpush.msra.mxu0 %v65
    %89 = vmatpush.msra.mxu0 %v64
    %90 = vmatpush.msra.mxu0 %v63
    %91 = vmatmul.f32.gmra.mxu0 %v73
    %v92 = vpop.f32.mrf.mxu0
    %v93 = vadd.f32 %v69, %v92
    %94 = vdwg.mxu0
    %s95 = scalar_lea.vmem [#allocation5], 32
    %v96 = vld [vmem:[%s95] sm:$0xff]
    %v97 = vld [vmem:[%s95 + $0x8] sm:$0xff]
    %v98 = vld [vmem:[%s95 + $0x10] sm:$0xff]
    %v99 = vld [vmem:[%s95 + $0x18] sm:$0xff]
    %s100 = scalar_lea.vmem [#allocation7], 1
    %v101 = vld [vmem:[%s100] sm:$0x1]
    %v103 = vperm.slane %v101, 0
    %105 = vmatpush.msra.mxu0 0.0
    %106 = vmatpush.msra.mxu0 0.0
    %107 = vmatpush.msra.mxu0 0.0
    %108 = vmatpush.msra.mxu0 0.0
    %109 = vmatpush.msra.mxu0 0.0
    %110 = vmatpush.msra.mxu0 0.0
    %111 = vmatpush.msra.mxu0 0.0
    %112 = vmatpush.msra.mxu0 0.0
    %113 = vmatpush.msra.mxu0 0.0
    %114 = vmatpush.msra.mxu0 0.0
    %115 = vmatpush.msra.mxu0 0.0
    %116 = vmatpush.msra.mxu0 0.0
    %117 = vmatpush.msra.mxu0 %v99
    %118 = vmatpush.msra.mxu0 %v98
    %119 = vmatpush.msra.mxu0 %v97
    %120 = vmatpush.msra.mxu0 %v96
    %121 = vmatmul.f32.gmra.mxu0 %v73
    %v122 = vpop.f32.mrf.mxu0
    %v123 = vadd.f32 %v103, %v122
    %124 = vdwg.mxu0
    %s125 = scalar_lea.vmem [#allocation5], 64
    %v126 = vld [vmem:[%s125] sm:$0xff]
    %v127 = vld [vmem:[%s125 + $0x8] sm:$0xff]
    %v128 = vld [vmem:[%s125 + $0x10] sm:$0xff]
    %v129 = vld [vmem:[%s125 + $0x18] sm:$0xff]
    %s130 = scalar_lea.vmem [#allocation7], 2
    %v131 = vld [vmem:[%s130] sm:$0x1]
    %v133 = vperm.slane %v131, 0
    %135 = vmatpush.msra.mxu0 0.0
    %136 = vmatpush.msra.mxu0 0.0
    %137 = vmatpush.msra.mxu0 0.0
    %138 = vmatpush.msra.mxu0 0.0
    %139 = vmatpush.msra.mxu0 0.0
    %140 = vmatpush.msra.mxu0 0.0
    %141 = vmatpush.msra.mxu0 0.0
    %142 = vmatpush.msra.mxu0 0.0
    %143 = vmatpush.msra.mxu0 0.0
    %144 = vmatpush.msra.mxu0 0.0
    %145 = vmatpush.msra.mxu0 0.0
    %146 = vmatpush.msra.mxu0 0.0
    %147 = vmatpush.msra.mxu0 %v129
    %148 = vmatpush.msra.mxu0 %v128
    %149 = vmatpush.msra.mxu0 %v127
    %150 = vmatpush.msra.mxu0 %v126
    %151 = vmatmul.f32.gmra.mxu0 %v73
    %v152 = vpop.f32.mrf.mxu0
    %v153 = vadd.f32 %v133, %v152
    %154 = vdwg.mxu0
    %v156 = vsel %vm71, %v93, 0
    %v159 = vsel %vm71, %v123, 0
    %161 = vmatpush.xpose.msra.mxu0 0.0
    %162 = vmatpush.xpose.msra.mxu0 0.0
    %163 = vmatpush.xpose.msra.mxu0 0.0
    %164 = vmatpush.xpose.msra.mxu0 0.0
    %165 = vmatpush.xpose.msra.mxu0 0.0
    %166 = vmatpush.xpose.msra.mxu0 0.0
    %167 = vmatpush.xpose.msra.mxu0 0.0
    %168 = vmatpush.xpose.msra.mxu0 0.0
    %169 = vmatpush.xpose.msra.mxu0 0.0
    %170 = vmatpush.xpose.msra.mxu0 0.0
    %171 = vmatpush.xpose.msra.mxu0 0.0
    %172 = vmatpush.xpose.msra.mxu0 0.0
    %173 = vmatpush.xpose.msra.mxu0 0.0
    %174 = vmatpush.xpose.msra.mxu0 0.0
    %175 = vmatpush.xpose.msra.mxu0 0.0
    %176 = vmatpush.xpose.msra.mxu0 %v159
    %177 = vmatmul.f32.gmra.mxu0 %v156
    %v178 = vpop.f32.mrf.mxu0
    %v179 = vadd.f32 0.0, %v178
    %180 = vdwg.mxu0
    %v181 = vmul.f32 %v179, 0.17677669
    %vm182 = vcmask 64512
    %v183 = vsel %vm182, %v181, -inf
    %184 = vmax.xlane.f32.xlu0 %v183
    %v185 = vpop.xlane.xlu0 %184
    %v186 = vsub.f32 %v181, %v185
    %v187 = vmul.f32 %v186, 1.442695
    %v188 = vpow.pop %v187
    %v189 = vsel %vm182, %v188, 0.0
    %190 = vadd.xlane.f32.xlu0 %v189
    %v191 = vpop.xlane.xlu0 %190
    %v192 = vrcp.pop %v191
    %v193 = vmul.f32 %v191, %v192
    %v194 = vsub.f32 1.0, %v193
    %v195 = vmul.f32 %v192, %v194
    %v196 = vadd.f32 %v192, %v195
    %vm197 = vweird.f32 %v191
    %vm198 = vweird.f32 %v192
    %vm199 = vmor %vm197, %vm198
    %v200 = vsel %vm199, %v192, %v196
    %v201 = vand.u32 2147483647, %v191
    %vm202 = vcmp.eq.f32.partialorder %v201, 8.507059e+37
    %v203 = vand.u32 %v191, 2147483648
    %v204 = vor.u32 1.1754944e-38, %v203
    %v205 = vsel %vm202, %v204, %v200
    %v206 = vmul.f32 %v188, %v205
    %v208 = vsel %vm182, %v206, 0
    %210 = vmatpush.msra.mxu0 0.0
    %211 = vmatpush.msra.mxu0 0.0
    %212 = vmatpush.msra.mxu0 0.0
    %213 = vmatpush.msra.mxu0 0.0
    %214 = vmatpush.msra.mxu0 0.0
    %215 = vmatpush.msra.mxu0 0.0
    %216 = vmatpush.msra.mxu0 0.0
    %217 = vmatpush.msra.mxu0 0.0
    %218 = vmatpush.msra.mxu0 0.0
    %219 = vmatpush.msra.mxu0 0.0
    %220 = vmatpush.msra.mxu0 0.0
    %221 = vmatpush.msra.mxu0 0.0
    %222 = vmatpush.msra.mxu0 0.0
    %223 = vmatpush.msra.mxu0 0.0
    %224 = vmatpush.msra.mxu0 0.0
    %225 = vmatpush.msra.mxu0 %v153
    %226 = vmatmul.f32.gmra.mxu0 %v208
    %v227 = vpop.f32.mrf.mxu0
    %v228 = vadd.f32 0.0, %v227
    %229 = vdwg.mxu0
    %230 = vst.msk [vmem:[#allocation8] sm:$0xff] %vm71, %v228
    %v231 = vld [vmem:[#allocation2 + $0x8] sm:$0xff]
    %s232 = scalar_lea.vmem [#allocation5], 96
    %v233 = vld [vmem:[%s232] sm:$0xff]
    %v234 = vld [vmem:[%s232 + $0x8] sm:$0xff]
    %v235 = vld [vmem:[%s232 + $0x10] sm:$0xff]
    %v236 = vld [vmem:[%s232 + $0x18] sm:$0xff]
    %s237 = scalar_lea.vmem [#allocation7], 3
    %v238 = vld [vmem:[%s237] sm:$0x1]
    %v240 = vperm.slane %v238, 0
    %v243 = vsel %vm71, %v231, 0
    %245 = vmatpush.msra.mxu0 0.0
    %246 = vmatpush.msra.mxu0 0.0
    %247 = vmatpush.msra.mxu0 0.0
    %248 = vmatpush.msra.mxu0 0.0
    %249 = vmatpush.msra.mxu0 0.0
    %250 = vmatpush.msra.mxu0 0.0
    %251 = vmatpush.msra.mxu0 0.0
    %252 = vmatpush.msra.mxu0 0.0
    %253 = vmatpush.msra.mxu0 0.0
    %254 = vmatpush.msra.mxu0 0.0
    %255 = vmatpush.msra.mxu0 0.0
    %256 = vmatpush.msra.mxu0 0.0
    %257 = vmatpush.msra.mxu0 %v236
    %258 = vmatpush.msra.mxu0 %v235
    %259 = vmatpush.msra.mxu0 %v234
    %260 = vmatpush.msra.mxu0 %v233
    %261 = vmatmul.f32.gmra.mxu0 %v243
    %v262 = vpop.f32.mrf.mxu0
    %v263 = vadd.f32 %v240, %v262
    %264 = vdwg.mxu0
    %s265 = scalar_lea.vmem [#allocation5], 128
    %v266 = vld [vmem:[%s265] sm:$0xff]
    %v267 = vld [vmem:[%s265 + $0x8] sm:$0xff]
    %v268 = vld [vmem:[%s265 + $0x10] sm:$0xff]
    %v269 = vld [vmem:[%s265 + $0x18] sm:$0xff]
    %s270 = scalar_lea.vmem [#allocation7], 4
    %v271 = vld [vmem:[%s270] sm:$0x1]
    %v273 = vperm.slane %v271, 0
    %275 = vmatpush.msra.mxu0 0.0
    %276 = vmatpush.msra.mxu0 0.0
    %277 = vmatpush.msra.mxu0 0.0
    %278 = vmatpush.msra.mxu0 0.0
    %279 = vmatpush.msra.mxu0 0.0
    %280 = vmatpush.msra.mxu0 0.0
    %281 = vmatpush.msra.mxu0 0.0
    %282 = vmatpush.msra.mxu0 0.0
    %283 = vmatpush.msra.mxu0 0.0
    %284 = vmatpush.msra.mxu0 0.0
    %285 = vmatpush.msra.mxu0 0.0
    %286 = vmatpush.msra.mxu0 0.0
    %287 = vmatpush.msra.mxu0 %v269
    %288 = vmatpush.msra.mxu0 %v268
    %289 = vmatpush.msra.mxu0 %v267
    %290 = vmatpush.msra.mxu0 %v266
    %291 = vmatmul.f32.gmra.mxu0 %v243
    %v292 = vpop.f32.mrf.mxu0
    %v293 = vadd.f32 %v273, %v292
    %294 = vdwg.mxu0
    %s295 = scalar_lea.vmem [#allocation5], 160
    %v296 = vld [vmem:[%s295] sm:$0xff]
    %v297 = vld [vmem:[%s295 + $0x8] sm:$0xff]
    %v298 = vld [vmem:[%s295 + $0x10] sm:$0xff]
    %v299 = vld [vmem:[%s295 + $0x18] sm:$0xff]
    %s300 = scalar_lea.vmem [#allocation7], 5
    %v301 = vld [vmem:[%s300] sm:$0x1]
    %v303 = vperm.slane %v301, 0
    %305 = vmatpush.msra.mxu0 0.0
    %306 = vmatpush.msra.mxu0 0.0
    %307 = vmatpush.msra.mxu0 0.0
    %308 = vmatpush.msra.mxu0 0.0
    %309 = vmatpush.msra.mxu0 0.0
    %310 = vmatpush.msra.mxu0 0.0
    %311 = vmatpush.msra.mxu0 0.0
    %312 = vmatpush.msra.mxu0 0.0
    %313 = vmatpush.msra.mxu0 0.0
    %314 = vmatpush.msra.mxu0 0.0
    %315 = vmatpush.msra.mxu0 0.0
    %316 = vmatpush.msra.mxu0 0.0
    %317 = vmatpush.msra.mxu0 %v299
    %318 = vmatpush.msra.mxu0 %v298
    %319 = vmatpush.msra.mxu0 %v297
    %320 = vmatpush.msra.mxu0 %v296
    %321 = vmatmul.f32.gmra.mxu0 %v243
    %v322 = vpop.f32.mrf.mxu0
    %v323 = vadd.f32 %v303, %v322
    %324 = vdwg.mxu0
    %v326 = vsel %vm71, %v263, 0
    %v329 = vsel %vm71, %v293, 0
    %331 = vmatpush.xpose.msra.mxu0 0.0
    %332 = vmatpush.xpose.msra.mxu0 0.0
    %333 = vmatpush.xpose.msra.mxu0 0.0
    %334 = vmatpush.xpose.msra.mxu0 0.0
    %335 = vmatpush.xpose.msra.mxu0 0.0
    %336 = vmatpush.xpose.msra.mxu0 0.0
    %337 = vmatpush.xpose.msra.mxu0 0.0
    %338 = vmatpush.xpose.msra.mxu0 0.0
    %339 = vmatpush.xpose.msra.mxu0 0.0
    %340 = vmatpush.xpose.msra.mxu0 0.0
    %341 = vmatpush.xpose.msra.mxu0 0.0
    %342 = vmatpush.xpose.msra.mxu0 0.0
    %343 = vmatpush.xpose.msra.mxu0 0.0
    %344 = vmatpush.xpose.msra.mxu0 0.0
    %345 = vmatpush.xpose.msra.mxu0 0.0
    %346 = vmatpush.xpose.msra.mxu0 %v329
    %347 = vmatmul.f32.gmra.mxu0 %v326
    %v348 = vpop.f32.mrf.mxu0
    %v349 = vadd.f32 0.0, %v348
    %350 = vdwg.mxu0
    %v351 = vmul.f32 %v349, 0.17677669
    %v352 = vsel %vm182, %v351, -inf
    %353 = vmax.xlane.f32.xlu0 %v352
    %v354 = vpop.xlane.xlu0 %353
    %v355 = vsub.f32 %v351, %v354
    %v356 = vmul.f32 %v355, 1.442695
    %v357 = vpow.pop %v356
    %v358 = vsel %vm182, %v357, 0.0
    %359 = vadd.xlane.f32.xlu0 %v358
    %v360 = vpop.xlane.xlu0 %359
    %v361 = vrcp.pop %v360
    %v362 = vmul.f32 %v360, %v361
    %v363 = vsub.f32 1.0, %v362
    %v364 = vmul.f32 %v361, %v363
    %v365 = vadd.f32 %v361, %v364
    %vm366 = vweird.f32 %v360
    %vm367 = vweird.f32 %v361
    %vm368 = vmor %vm366, %vm367
    %v369 = vsel %vm368, %v361, %v365
    %v370 = vand.u32 2147483647, %v360
    %vm371 = vcmp.eq.f32.partialorder %v370, 8.507059e+37
    %v372 = vand.u32 %v360, 2147483648
    %v373 = vor.u32 1.1754944e-38, %v372
    %v374 = vsel %vm371, %v373, %v369
    %v375 = vmul.f32 %v357, %v374
    %v377 = vsel %vm182, %v375, 0
    %379 = vmatpush.msra.mxu0 0.0
    %380 = vmatpush.msra.mxu0 0.0
    %381 = vmatpush.msra.mxu0 0.0
    %382 = vmatpush.msra.mxu0 0.0
    %383 = vmatpush.msra.mxu0 0.0
    %384 = vmatpush.msra.mxu0 0.0
    %385 = vmatpush.msra.mxu0 0.0
    %386 = vmatpush.msra.mxu0 0.0
    %387 = vmatpush.msra.mxu0 0.0
    %388 = vmatpush.msra.mxu0 0.0
    %389 = vmatpush.msra.mxu0 0.0
    %390 = vmatpush.msra.mxu0 0.0
    %391 = vmatpush.msra.mxu0 0.0
    %392 = vmatpush.msra.mxu0 0.0
    %393 = vmatpush.msra.mxu0 0.0
    %394 = vmatpush.msra.mxu0 %v323
    %395 = vmatmul.f32.gmra.mxu0 %v377
    %v396 = vpop.f32.mrf.mxu0
    %v397 = vadd.f32 0.0, %v396
    %398 = vdwg.mxu0
    %399 = vst.msk [vmem:[#allocation8 + $0x8] sm:$0xff] %vm71, %v397
    // Predicated region
    $region26: #{tpu_custom_call.1} parent=1 // pred_check
      _
    $region27: #{tpu_custom_call.1} parent=1 // pred_check_branch
      %401 = sbr.rel (0) target = $region29
    $region28: #{tpu_custom_call.1} parent=1 // pred_region
      %403 = vsyncadd [#allocation4], 0
      %s404 = sshll.u32 [#allocation8], 4
      %s405 = int_to_ptr.vmem [resolvable:$true] %s404
      %s406 = sshll.u32 %s3, 4
      %s407 = int_to_ptr.hbm [resolvable:$true] %s406
      %412 = dma.vmem_to_hbm [thread:$0]  %s405, 256, %s407, [#allocation4], 128, 128, 8
    $region29: #{tpu_custom_call.1} parent=1 // pred_fallthru
      _
    // Predicated region
    $region30: #{tpu_custom_call.1} parent=1 // pred_check
      _
    $region31: #{tpu_custom_call.1} parent=1 // pred_check_branch
      %414 = sbr.rel (0) target = $region33
    $region32: #{tpu_custom_call.1} parent=1 // pred_region
      %416 = dma.done [#allocation4], 256
    $region33: #{tpu_custom_call.1} parent=1 // pred_fallthru
      _
    %417 = vsyncpa [#allocation3], 1
    %418 = vsyncpa [#allocation6], 1
    %419 = vsyncpa [#allocation4], 1

</llo_original>
